<compile_context>
chip_gen: v5e
topology: v5e:2x2
jax: 0.10.0
libtpu: 0.0.40
codegen_flags: <defaults>
</compile_context>

<pallas_src>
import functools

import jax
import jax.numpy as jnp
from jax import lax
from jax.experimental import pallas as pl
from jax.experimental.pallas import tpu as pltpu


def _label_smoothing_kernel(pred_ref, target_ref, out_ref, *,
                            confidence, off_value, n_rows, tile_n):
    i = pl.program_id(0)

    # Load native dtype, cast in-register (no wrapper-side f32 copy in HBM).
    pred = pred_ref[...].astype(jnp.float32)        # (tile_n, C)
    tgt = target_ref[...]                           # (tile_n, 1) int32
    tn, c = pred.shape

    # Numerically stable log-softmax pieces (logp = shifted - lse).
    row_max = jnp.max(pred, axis=-1, keepdims=True)                   # (tn,1)
    shifted = pred - row_max                                          # (tn,C)
    lse = jnp.log(jnp.sum(jnp.exp(shifted), axis=-1, keepdims=True))  # (tn,1)

    # Fused weighted reduce:  sum_c true_dist[n,c] * shifted[n,c]
    # with true_dist = off everywhere, confidence at the target class.
    col = lax.broadcasted_iota(jnp.int32, (tn, c), 1)
    weights = jnp.where(col == tgt,
                        jnp.float32(confidence), jnp.float32(off_value))
    weighted = jnp.sum(weights * shifted, axis=-1, keepdims=True)     # (tn,1)

    # Since sum_c true_dist = 1:  loss_n = lse_n - weighted_n
    per_row = lse - weighted                                          # (tn,1)

    # Select-mask rows past N (partial last tile may contain garbage / inf /
    # NaN; select guarantees it does not propagate into the partial sum).
    row = lax.broadcasted_iota(jnp.int32, (tn, 1), 0) + i * tile_n
    per_row = jnp.where(row < n_rows, per_row, 0.0)

    # Per-tile partial sum, written lane-dense; the mean is finished in JAX.
    partial = jnp.sum(per_row, axis=0, keepdims=True)                 # (1,1)
    out_ref[...] = jnp.broadcast_to(partial.reshape(1, 1, 1), (1, 8, 128))


def label_smoothing_loss(pred, target, classes=10, smoothing=0.1, tile_n=4096):
    """pred: [N, C] float logits (any float dtype), target: [N] int class ids
    -> scalar f32 loss."""
    n, c = pred.shape
    assert c == classes
    confidence = 1.0 - smoothing
    off_value = smoothing / (classes - 1)

    target2d = target.reshape(n, 1).astype(jnp.int32)   # free reshape, no pad

    # Row tile: multiple of 8 (sublane); clamp only so tiny N doesn't
    # over-allocate VMEM.  For large N the default (4096) is the tile size.
    tile_n = ((tile_n + 7) // 8) * 8
    tile_n = max(8, min(tile_n, ((n + 7) // 8) * 8))
    num_tiles = pl.cdiv(n, tile_n)                      # partial last block OK

    # VMEM budget: pred + target blocks are lane-padded to 128 lanes, f32,
    # double-buffered.  Keep generation headroom in mind (v7x: 64 MiB/TC).
    lane_row_bytes = ((c + 127) // 128) * 128 * 4
    vmem_need = 2 * 2 * tile_n * max(lane_row_bytes, 512) + (2 << 20)
    vmem_limit = min(max(vmem_need, 32 << 20), 60 << 20)

    kernel = functools.partial(
        _label_smoothing_kernel,
        confidence=confidence,
        off_value=off_value,
        n_rows=n,
        tile_n=tile_n,
    )

    partials = pl.pallas_call(
        kernel,
        out_shape=jax.ShapeDtypeStruct((num_tiles, 8, 128), jnp.float32),
        grid_spec=pltpu.PrefetchScalarGridSpec(
            num_scalar_prefetch=0,
            grid=(num_tiles,),
            in_specs=[
                pl.BlockSpec((tile_n, c), lambda i: (i, 0)),   # logits row tile
                pl.BlockSpec((tile_n, 1), lambda i: (i, 0)),   # target row tile
            ],
            out_specs=pl.BlockSpec((1, 8, 128), lambda i: (i, 0, 0)),
        ),
        compiler_params=pltpu.CompilerParams(
            dimension_semantics=("parallel",),     # independent tiles -> both TCs on v7x
            vmem_limit_bytes=vmem_limit,
        ),
    )(pred, target2d)

    # Finish the mean in JAX (tiny: num_tiles values).
    return jnp.sum(partials[:, 0, 0]) * jnp.float32(1.0 / n)


def _reference(pred, target, classes=10, smoothing=0.1):
    confidence = 1.0 - smoothing
    logp = jax.nn.log_softmax(pred.astype(jnp.float32), axis=-1)
    true_dist = jnp.full_like(logp, smoothing / (classes - 1))
    true_dist = true_dist.at[jnp.arange(pred.shape[0]), target].set(confidence)
    return jnp.mean(jnp.sum(-true_dist * logp, axis=-1))


if __name__ == "__main__":
    key = jax.random.PRNGKey(0)
    k1, k2, k3, k4, k5, k6 = jax.random.split(key, 6)

    # Small f32 case (single tile).
    N, C = 8, 10
    pred = jax.random.normal(k1, (N, C), dtype=jnp.float32)
    target = jax.random.randint(k2, (N,), 0, C, dtype=jnp.int32)
    loss = label_smoothing_loss(pred, target, classes=C, smoothing=0.1)
    jax.block_until_ready(loss)
    ref = _reference(pred, target, classes=C, smoothing=0.1)
    assert jnp.allclose(loss, ref, atol=1e-5, rtol=1e-5), (loss, ref)

    # Multi-tile path with a partial last block (300 = 2*128 + 44), no padding.
    N2 = 300
    pred2 = jax.random.normal(k3, (N2, C), dtype=jnp.float32)
    target2 = jax.random.randint(k4, (N2,), 0, C, dtype=jnp.int32)
    loss2 = label_smoothing_loss(pred2, target2, classes=C, smoothing=0.1,
                                 tile_n=128)
    jax.block_until_ready(loss2)
    ref2 = _reference(pred2, target2, classes=C, smoothing=0.1)
    assert jnp.allclose(loss2, ref2, atol=1e-5, rtol=1e-5), (loss2, ref2)

    # bf16 logits path (no wrapper-side f32 copy; cast happens in-kernel).
    N3 = 64
    pred3 = jax.random.normal(k5, (N3, C), dtype=jnp.bfloat16)
    target3 = jax.random.randint(k6, (N3,), 0, C, dtype=jnp.int32)
    loss3 = label_smoothing_loss(pred3, target3, classes=C, smoothing=0.1)
    jax.block_until_ready(loss3)
    ref3 = _reference(pred3, target3, classes=C, smoothing=0.1)
    assert jnp.allclose(loss3, ref3, atol=1e-3, rtol=1e-3), (loss3, ref3)

    print("KERNEL_OK")
</pallas_src>

<mosaic_0001>
module attributes {stable_mosaic.version = 11 : i64} {
  func.func @_label_smoothing_kernel(%arg0: i32, %arg1: memref<8x10xf32, #tpu.memory_space<vmem>>, %arg2: memref<8x1xi32, #tpu.memory_space<vmem>>, %arg3: memref<1x8x128xf32, #tpu.memory_space<vmem>>) attributes {dimension_semantics = [#tpu.dimension_semantics<parallel>], iteration_bounds = array<i64: 1>, scalar_prefetch = 0 : i64, scratch_operands = 0 : i64, tpu.core_type = #tpu.core_type<tc>, window_params = [{transform_indices = @transform_0, window_bounds = array<i64: 8, 10>}, {transform_indices = @transform_1, window_bounds = array<i64: 8, 1>}, {transform_indices = @transform_2, window_bounds = array<i64: 1, 8, 128>}]} {
    %c0 = arith.constant 0 : index
    %c0_0 = arith.constant 0 : index
    %0 = vector.load %arg1[%c0, %c0_0] : memref<8x10xf32, #tpu.memory_space<vmem>>, vector<8x10xf32>
    %c0_1 = arith.constant 0 : index
    %c0_2 = arith.constant 0 : index
    %1 = vector.load %arg2[%c0_1, %c0_2] : memref<8x1xi32, #tpu.memory_space<vmem>>, vector<8x1xi32>
    %cst = arith.constant dense<0xFF800000> : vector<8xf32>
    %2 = vector.multi_reduction <maximumf>, %0, %cst [1] : vector<8x10xf32> to vector<8xf32>
    %3 = vector.shape_cast %2 : vector<8xf32> to vector<8x1xf32>
    %4 = vector.broadcast %3 : vector<8x1xf32> to vector<8x10xf32>
    %5 = arith.subf %0, %4 : vector<8x10xf32>
    %6 = math.exp %5 : vector<8x10xf32>
    %cst_3 = arith.constant dense<0.000000e+00> : vector<8xf32>
    %7 = vector.multi_reduction <add>, %6, %cst_3 [1] : vector<8x10xf32> to vector<8xf32>
    %8 = vector.shape_cast %7 : vector<8xf32> to vector<8x1xf32>
    %9 = math.log %8 : vector<8x1xf32>
    %10 = tpu.iota {dimensions = array<i32: 1>} : vector<8x10xi32>
    %11 = vector.broadcast %1 : vector<8x1xi32> to vector<8x10xi32>
    %12 = arith.cmpi eq, %10, %11 : vector<8x10xi32>
    %cst_4 = arith.constant 0.899999976 : f32
    %cst_5 = arith.constant 0.0111111114 : f32
    %13 = vector.broadcast %cst_4 : f32 to vector<8x10xf32>
    %14 = vector.broadcast %cst_5 : f32 to vector<8x10xf32>
    %15 = arith.select %12, %13, %14 : vector<8x10xi1>, vector<8x10xf32>
    %16 = arith.mulf %15, %5 : vector<8x10xf32>
    %cst_6 = arith.constant dense<0.000000e+00> : vector<8xf32>
    %17 = vector.multi_reduction <add>, %16, %cst_6 [1] : vector<8x10xf32> to vector<8xf32>
    %18 = vector.shape_cast %17 : vector<8xf32> to vector<8x1xf32>
    %19 = arith.subf %9, %18 : vector<8x1xf32>
    %20 = tpu.iota {dimensions = array<i32: 0>} : vector<8x1xi32>
    %c8_i32 = arith.constant 8 : i32
    %21 = arith.muli %arg0, %c8_i32 : i32
    %22 = vector.broadcast %21 : i32 to vector<8x1xi32>
    %23 = arith.addi %20, %22 : vector<8x1xi32>
    %c8_i32_7 = arith.constant 8 : i32
    %24 = vector.broadcast %c8_i32_7 : i32 to vector<8x1xi32>
    %25 = arith.cmpi slt, %23, %24 : vector<8x1xi32>
    %cst_8 = arith.constant 0.000000e+00 : f32
    %26 = vector.broadcast %cst_8 : f32 to vector<8x1xf32>
    %27 = arith.select %25, %19, %26 : vector<8x1xi1>, vector<8x1xf32>
    %cst_9 = arith.constant dense<0.000000e+00> : vector<1xf32>
    %28 = vector.multi_reduction <add>, %27, %cst_9 [0] : vector<8x1xf32> to vector<1xf32>
    %29 = vector.shape_cast %28 : vector<1xf32> to vector<1x1xf32>
    %30 = vector.shape_cast %29 : vector<1x1xf32> to vector<1x1x1xf32>
    %31 = vector.shape_cast %30 : vector<1x1x1xf32> to vector<1x1x1xf32>
    %32 = vector.broadcast %31 : vector<1x1x1xf32> to vector<1x8x128xf32>
    %c0_10 = arith.constant 0 : index
    %c0_11 = arith.constant 0 : index
    %c0_12 = arith.constant 0 : index
    %33 = vector.load %arg3[%c0_10, %c0_11, %c0_12] : memref<1x8x128xf32, #tpu.memory_space<vmem>>, vector<1x8x128xf32>
    tpu.vector_store %arg3[%c0_10, %c0_11, %c0_12], %32 {strides = array<i32>} : memref<1x8x128xf32, #tpu.memory_space<vmem>>, vector<1x8x128xf32>,
    return
  }
  func.func @transform_0(%arg0: i32) -> (i32, i32) {
    %c0_i32 = arith.constant 0 : i32
    %c0_i32_0 = arith.constant 0 : i32
    return %arg0, %c0_i32 : i32, i32
  }
  func.func @transform_1(%arg0: i32) -> (i32, i32) {
    %c0_i32 = arith.constant 0 : i32
    %c0_i32_0 = arith.constant 0 : i32
    return %arg0, %c0_i32 : i32, i32
  }
  func.func @transform_2(%arg0: i32) -> (i32, i32, i32) {
    %c0_i32 = arith.constant 0 : i32
    %c0_i32_0 = arith.constant 0 : i32
    %c0_i32_1 = arith.constant 0 : i32
    return %arg0, %c0_i32, %c0_i32_0 : i32, i32, i32
  }
}

</mosaic_0001>

<llo_original>
// kernel: tpu_custom_call.1
$region0: #{tpu_custom_call.1}
  #allocation0 [shape = 'u32[]', space=smem, size = 0x4, offset = 0x4, fixed_abs, tag = 'smem constant byte address 0x4 - core index']
  #allocation1 [shape = 'u32[72,128]{1,0:T(1,128)}', space=vmem, size = 0x9000, scoped, tag = 'internal scratch']
  %s0 = inlined_call_operand.vmem [shape: f32[8,10], index: 0, kind: input, shape index: {}]
  %s1 = inlined_call_operand.vmem [shape: s32[8,1], index: 1, kind: input, shape index: {}]
  %s2 = inlined_call_operand.hbm [shape: f32[1,8,128], index: 2, kind: output, shape index: {}]
  %s3 = sld [smem:[#allocation0]]
  $region18: #{tpu_custom_call.1} parent=0
    _
  %s5 = ssub.s32 1, %s3
  %s6 = scalar_select 0, %s5, %s3
  $region1: #{tpu_custom_call.1} parent=0
    #allocation2 [shape = 'u8[4096]{0}', space=vmem, size = 0x1000, scoped, tag = 'output window, operand 0, single buffered']
    #allocation3 [shape = 's32[1]{0}', space=sflag, size = 0x4, scoped, tag = 'scoped memory for tpu_custom_call.1']
    %7 = vsyncpa [#allocation3], 0
    // Predicated region
    $region2: #{tpu_custom_call.1} parent=1 // pred_check
      _
    $region3: #{tpu_custom_call.1} parent=1 // pred_check_branch
      %9 = sbr.rel (0) target = $region5
    $region4: #{tpu_custom_call.1} parent=1 // pred_region
      _
    $region5: #{tpu_custom_call.1} parent=1 // pred_fallthru
      _
    // Predicated region
    $region6: #{tpu_custom_call.1} parent=1 // pred_check
      _
    $region7: #{tpu_custom_call.1} parent=1 // pred_check_branch
      %11 = sbr.rel (0) target = $region9
    $region8: #{tpu_custom_call.1} parent=1 // pred_region
      _
    $region9: #{tpu_custom_call.1} parent=1 // pred_fallthru
      _
    %v12 = vld [vmem:[%s0] sm:$0xff]
    %v13 = vld [vmem:[%s1] sm:$0xff]
    %vm14 = vcmask 80896
    %v15 = vsel %vm14, %v12, -inf
    %16 = vmax.xlane.f32.xlu0 %v15
    %v17 = vpop.xlane.xlu0 %16
    %v18 = vsub.f32 %v12, %v17
    %v19 = vmul.f32 %v18, 1.442695
    %v20 = vpow.pop %v19
    %v21 = vsel %vm14, %v20, 0.0
    %22 = vadd.xlane.f32.xlu0 %v21
    %v23 = vpop.xlane.xlu0 %22
    %v24 = vlog2.pop %v23
    %v25 = vmul.f32 %v24, 0.6931472
    %v26 = vlaneseq
    %v27 = vand.u32 %v26, 127
    %28 = vset.pattern.permute.xlu0 0
    %29 = vperm.xlu0 %28, %v13
    %v30 = vpop.permute.xlu0 %29
    %vm31 = vcmp.eq.s32.totalorder %v27, %v30
    %v32 = vsel %vm31, 0.9, 0.011111111
    %v33 = vmul.f32 %v32, %v18
    %v34 = vsel %vm14, %v33, 0.0
    %35 = vadd.xlane.f32.xlu0 %v34
    %v36 = vpop.xlane.xlu0 %35
    %v37 = vsub.f32 %v25, %v36
    %v38 = vlaneseq
    %v39 = vshrl.u32 %v38, 7
    %s40 = smul.u32 0, 8
    %v41 = vstv %s40
    %v42 = vadd.s32 %v39, %v41
    %vm43 = vcmp.lt.s32.totalorder %v42, 8
    %v44 = vsel %vm43, %v37, 0.0
    %v45 = vrot.slane %v44, 4
    %v46 = vadd.f32 %v44, %v45
    %v47 = vrot.slane %v46, 2
    %v48 = vadd.f32 %v46, %v47
    %v49 = vrot.slane %v48, 1
    %v50 = vadd.f32 %v48, %v49
    %51 = vst [vmem:[#allocation2] sm:$0xff] %v50
    // Predicated region
    $region10: #{tpu_custom_call.1} parent=1 // pred_check
      _
    $region11: #{tpu_custom_call.1} parent=1 // pred_check_branch
      %53 = sbr.rel (0) target = $region13
    $region12: #{tpu_custom_call.1} parent=1 // pred_region
      %55 = vsyncadd [#allocation3], 0
      %s57 = sshll.u32 [#allocation2], 4
      %s58 = int_to_ptr.vmem [resolvable:$true] %s57
      %s59 = sshll.u32 %s2, 4
      %s60 = int_to_ptr.hbm [resolvable:$true] %s59
      %62 = dma.vmem_to_hbm [thread:$0]  %s58, 128, %s60, [#allocation3]
    $region13: #{tpu_custom_call.1} parent=1 // pred_fallthru
      _
    // Predicated region
    $region14: #{tpu_custom_call.1} parent=1 // pred_check
      _
    $region15: #{tpu_custom_call.1} parent=1 // pred_check_branch
      %64 = sbr.rel (0) target = $region17
    $region16: #{tpu_custom_call.1} parent=1 // pred_region
      %66 = dma.done [#allocation3], 128
    $region17: #{tpu_custom_call.1} parent=1 // pred_fallthru
      _
    %67 = vsyncpa [#allocation3], 1

</llo_original>
